<compile_context>
chip_gen: v6e
topology: v6e:2x2x1
jax: 0.10.0
libtpu: 0.0.40
codegen_flags: <defaults>
</compile_context>

<pallas_src>
import jax
import jax.numpy as jnp
from jax.experimental import pallas as pl
from jax.experimental.pallas import tpu as pltpu

EMB_DIM = 1024   # emb_dim in the PyTorch module
COND_DIM = 128   # cond_dim in the PyTorch module


def _round_up(n, m):
    return ((n + m - 1) // m) * m


def _pick_tile_m(batch, tile_m):
    """Rows per grid step: small batches get one full-array block, larger batches
    get >= 2 steps (v7x megacore) capped at tile_m, with at most ~8 wasted rows."""
    if batch <= 8:
        return batch                                   # block == full array dim (allowed)
    half = _round_up(pl.cdiv(batch, 2), 8)             # aim for >= 2 grid steps
    return min(tile_m, half)


def cond_augment_kernel(x_ref, w_ref, b_ref, eps_ref, cond_ref, mean_ref, sigma_ref):
    # MXU: bf16 operands with f32 accumulation; x is cast in-kernel so the wrapper
    # never does a separate cast/pad pass over x in HBM.
    x = x_ref[...].astype(jnp.bfloat16)
    h = jnp.dot(x, w_ref[...], preferred_element_type=jnp.float32)
    h = jnp.maximum(h + b_ref[...], 0.0)               # bias + ReLU in f32

    mean = h[:, :COND_DIM]
    sigma = h[:, COND_DIM:]                            # log-variance head
    cond = jnp.exp(sigma * 0.5) * eps_ref[...] + mean  # reparameterization

    # Three 128-lane-wide outputs -> unmasked full-lane stores, no concat temporary.
    cond_ref[...] = cond.astype(cond_ref.dtype)
    mean_ref[...] = mean.astype(mean_ref.dtype)
    sigma_ref[...] = sigma.astype(sigma_ref.dtype)


def cond_augment(x, w, b, key, *, tile_m=512, out_dtype=jnp.float32):
    """x: (B, EMB_DIM) f32, w: (EMB_DIM, 2*COND_DIM) (ideally bf16), b: (2*COND_DIM,) f32.
    Returns (condition, mean, sigma), each (B, COND_DIM) in out_dtype."""
    B = x.shape[0]
    assert x.shape == (B, EMB_DIM)

    # Only the MXU weight needs bf16; this is a no-op if the caller already keeps
    # the parameter in bf16 (cast once at parameter creation, not per step).
    wb = w if w.dtype == jnp.bfloat16 else w.astype(jnp.bfloat16)
    b2d = b.reshape(1, 2 * COND_DIM).astype(jnp.float32)

    # Standard-normal noise (PyTorch: FloatTensor(...).normal_()).
    # TODO(synk): on real TPU this could use the in-kernel hardware PRNG
    # (pltpu.prng_seed + prng_random_bits) to remove ~512 B/row of HBM traffic,
    # but that primitive does not lower under interpret mode.
    eps = jax.random.normal(key, (B, COND_DIM), jnp.float32)

    tm = _pick_tile_m(B, tile_m)
    grid = (pl.cdiv(B, tm),)

    cond, mean, sigma = pl.pallas_call(
        cond_augment_kernel,
        out_shape=(
            jax.ShapeDtypeStruct((B, COND_DIM), out_dtype),
            jax.ShapeDtypeStruct((B, COND_DIM), out_dtype),
            jax.ShapeDtypeStruct((B, COND_DIM), out_dtype),
        ),
        grid=grid,
        in_specs=[
            pl.BlockSpec((tm, EMB_DIM), lambda i: (i, 0)),              # x tile
            pl.BlockSpec((EMB_DIM, 2 * COND_DIM), lambda i: (0, 0)),    # W resident
            pl.BlockSpec((1, 2 * COND_DIM), lambda i: (0, 0)),          # b resident
            pl.BlockSpec((tm, COND_DIM), lambda i: (i, 0)),             # eps tile
        ],
        out_specs=(
            pl.BlockSpec((tm, COND_DIM), lambda i: (i, 0)),             # condition
            pl.BlockSpec((tm, COND_DIM), lambda i: (i, 0)),             # mean
            pl.BlockSpec((tm, COND_DIM), lambda i: (i, 0)),             # sigma
        ),
        compiler_params=pltpu.CompilerParams(
            dimension_semantics=("parallel",),          # shard batch grid over TCs (v7x)
        ),
    )(x, wb, b2d, eps)
    return cond, mean, sigma


if __name__ == "__main__":
    root = jax.random.PRNGKey(0)
    k_x, k_w, k_b, k_eps = jax.random.split(root, 4)

    B = 2
    # Deterministic synthetic parameters (nn.Linear(emb_dim, cond_dim*2)).
    w = (jax.random.normal(k_w, (EMB_DIM, 2 * COND_DIM), jnp.float32)
         * (1.0 / jnp.sqrt(EMB_DIM)))
    b = jax.random.normal(k_b, (2 * COND_DIM,), jnp.float32) * 0.01
    x = jax.random.normal(k_x, (B, EMB_DIM), jnp.float32)

    # Cast the weight to bf16 once, at "parameter creation" time (outside any step loop).
    w_bf16 = w.astype(jnp.bfloat16)

    condition, mean, sigma = cond_augment(x, w_bf16, b, k_eps)
    jax.block_until_ready((condition, mean, sigma))

    # Reference (same bf16 MXU operands, f32 accumulate, same noise key -> fully deterministic).
    h_ref = jnp.maximum(
        jnp.dot(x.astype(jnp.bfloat16), w_bf16, preferred_element_type=jnp.float32) + b, 0.0)
    mean_ref = h_ref[:, :COND_DIM]
    sigma_ref = h_ref[:, COND_DIM:]
    eps_ref = jax.random.normal(k_eps, (B, COND_DIM), jnp.float32)
    cond_ref = jnp.exp(sigma_ref * 0.5) * eps_ref + mean_ref

    assert condition.shape == (B, COND_DIM)
    assert mean.shape == (B, COND_DIM)
    assert sigma.shape == (B, COND_DIM)
    assert jnp.allclose(mean, mean_ref, atol=1e-2, rtol=1e-2)
    assert jnp.allclose(sigma, sigma_ref, atol=1e-2, rtol=1e-2)
    assert jnp.allclose(condition, cond_ref, atol=1e-2, rtol=1e-2)
    assert bool(jnp.all(jnp.isfinite(condition)))

    print("KERNEL_OK")
</pallas_src>

<mosaic_0001>
module attributes {stable_mosaic.version = 11 : i64} {
  func.func @cond_augment_kernel(%arg0: i32, %arg1: memref<2x1024xf32, #tpu.memory_space<vmem>>, %arg2: memref<1024x256xbf16, #tpu.memory_space<vmem>>, %arg3: memref<1x256xf32, #tpu.memory_space<vmem>>, %arg4: memref<2x128xf32, #tpu.memory_space<vmem>>, %arg5: memref<2x128xf32, #tpu.memory_space<vmem>>, %arg6: memref<2x128xf32, #tpu.memory_space<vmem>>, %arg7: memref<2x128xf32, #tpu.memory_space<vmem>>) attributes {dimension_semantics = [#tpu.dimension_semantics<parallel>], iteration_bounds = array<i64: 1>, scalar_prefetch = 0 : i64, scratch_operands = 0 : i64, tpu.core_type = #tpu.core_type<tc>, window_params = [{transform_indices = @transform_0, window_bounds = array<i64: 2, 1024>}, {pipeline_mode = #tpu.pipeline_mode<synchronous>, transform_indices = @transform_1, window_bounds = array<i64: 1024, 256>}, {pipeline_mode = #tpu.pipeline_mode<synchronous>, transform_indices = @transform_2, window_bounds = array<i64: 1, 256>}, {transform_indices = @transform_3, window_bounds = array<i64: 2, 128>}, {transform_indices = @transform_4, window_bounds = array<i64: 2, 128>}, {transform_indices = @transform_5, window_bounds = array<i64: 2, 128>}, {transform_indices = @transform_6, window_bounds = array<i64: 2, 128>}]} {
    %c0 = arith.constant 0 : index
    %c0_0 = arith.constant 0 : index
    %0 = vector.load %arg1[%c0, %c0_0] : memref<2x1024xf32, #tpu.memory_space<vmem>>, vector<2x1024xf32>
    %1 = arith.truncf %0 : vector<2x1024xf32> to vector<2x1024xbf16>
    %c0_1 = arith.constant 0 : index
    %c0_2 = arith.constant 0 : index
    %2 = vector.load %arg2[%c0_1, %c0_2] : memref<1024x256xbf16, #tpu.memory_space<vmem>>, vector<1024x256xbf16>
    %cst = arith.constant dense<0.000000e+00> : vector<2x256xf32>
    %3 = tpu.matmul %1, %2, %cst {dimension_numbers = #tpu.dot_dimension_numbers<[1], [0], [0], [1], [0, 0, 1, 1], [], []>} : vector<2x1024xbf16>, vector<1024x256xbf16>, vector<2x256xf32> -> vector<2x256xf32>
    %c0_3 = arith.constant 0 : index
    %c0_4 = arith.constant 0 : index
    %4 = vector.load %arg3[%c0_3, %c0_4] : memref<1x256xf32, #tpu.memory_space<vmem>>, vector<1x256xf32>
    %5 = vector.broadcast %4 : vector<1x256xf32> to vector<2x256xf32>
    %6 = arith.addf %3, %5 : vector<2x256xf32>
    %cst_5 = arith.constant 0.000000e+00 : f32
    %7 = vector.broadcast %cst_5 : f32 to vector<2x256xf32>
    %8 = arith.maximumf %6, %7 : vector<2x256xf32>
    %9 = vector.extract_strided_slice %8 {offsets = [0, 0], sizes = [2, 128], strides = [1, 1]} : vector<2x256xf32> to vector<2x128xf32>
    %10 = vector.extract_strided_slice %8 {offsets = [0, 128], sizes = [2, 128], strides = [1, 1]} : vector<2x256xf32> to vector<2x128xf32>
    %cst_6 = arith.constant 5.000000e-01 : f32
    %11 = vector.broadcast %cst_6 : f32 to vector<2x128xf32>
    %12 = arith.mulf %10, %11 : vector<2x128xf32>
    %13 = math.exp %12 : vector<2x128xf32>
    %c0_7 = arith.constant 0 : index
    %c0_8 = arith.constant 0 : index
    %14 = vector.load %arg4[%c0_7, %c0_8] : memref<2x128xf32, #tpu.memory_space<vmem>>, vector<2x128xf32>
    %15 = arith.mulf %13, %14 : vector<2x128xf32>
    %16 = arith.addf %15, %9 : vector<2x128xf32>
    %c0_9 = arith.constant 0 : index
    %c0_10 = arith.constant 0 : index
    %17 = vector.load %arg5[%c0_9, %c0_10] : memref<2x128xf32, #tpu.memory_space<vmem>>, vector<2x128xf32>
    tpu.vector_store %arg5[%c0_9, %c0_10], %16 {strides = array<i32>} : memref<2x128xf32, #tpu.memory_space<vmem>>, vector<2x128xf32>,
    %c0_11 = arith.constant 0 : index
    %c0_12 = arith.constant 0 : index
    %18 = vector.load %arg6[%c0_11, %c0_12] : memref<2x128xf32, #tpu.memory_space<vmem>>, vector<2x128xf32>
    tpu.vector_store %arg6[%c0_11, %c0_12], %9 {strides = array<i32>} : memref<2x128xf32, #tpu.memory_space<vmem>>, vector<2x128xf32>,
    %c0_13 = arith.constant 0 : index
    %c0_14 = arith.constant 0 : index
    %19 = vector.load %arg7[%c0_13, %c0_14] : memref<2x128xf32, #tpu.memory_space<vmem>>, vector<2x128xf32>
    tpu.vector_store %arg7[%c0_13, %c0_14], %10 {strides = array<i32>} : memref<2x128xf32, #tpu.memory_space<vmem>>, vector<2x128xf32>,
    return
  }
  func.func @transform_0(%arg0: i32) -> (i32, i32) {
    %c0_i32 = arith.constant 0 : i32
    %c0_i32_0 = arith.constant 0 : i32
    return %arg0, %c0_i32 : i32, i32
  }
  func.func @transform_1(%arg0: i32) -> (i32, i32) {
    %c0_i32 = arith.constant 0 : i32
    %c0_i32_0 = arith.constant 0 : i32
    %c0_i32_1 = arith.constant 0 : i32
    return %c0_i32, %c0_i32_0 : i32, i32
  }
  func.func @transform_2(%arg0: i32) -> (i32, i32) {
    %c0_i32 = arith.constant 0 : i32
    %c0_i32_0 = arith.constant 0 : i32
    %c0_i32_1 = arith.constant 0 : i32
    return %c0_i32, %c0_i32_0 : i32, i32
  }
  func.func @transform_3(%arg0: i32) -> (i32, i32) {
    %c0_i32 = arith.constant 0 : i32
    %c0_i32_0 = arith.constant 0 : i32
    return %arg0, %c0_i32 : i32, i32
  }
  func.func @transform_4(%arg0: i32) -> (i32, i32) {
    %c0_i32 = arith.constant 0 : i32
    %c0_i32_0 = arith.constant 0 : i32
    return %arg0, %c0_i32 : i32, i32
  }
  func.func @transform_5(%arg0: i32) -> (i32, i32) {
    %c0_i32 = arith.constant 0 : i32
    %c0_i32_0 = arith.constant 0 : i32
    return %arg0, %c0_i32 : i32, i32
  }
  func.func @transform_6(%arg0: i32) -> (i32, i32) {
    %c0_i32 = arith.constant 0 : i32
    %c0_i32_0 = arith.constant 0 : i32
    return %arg0, %c0_i32 : i32, i32
  }
}

</mosaic_0001>

<llo_original>
// kernel: tpu_custom_call.1
$region0: #{tpu_custom_call.1}
  #allocation0 [shape = 'u32[]', space=smem, size = 0x4, offset = 0x4, fixed_abs, tag = 'smem constant byte address 0x4 - core index']
  #allocation1 [shape = 'u32[144,128]{1,0:T(1,128)}', space=vmem, size = 0x12000, scoped, tag = 'internal scratch']
  %s0 = inlined_call_operand.hbm [shape: f32[2,1024], index: 0, kind: input, shape index: {}]
  %s1 = inlined_call_operand.hbm [shape: bf16[1024,256], index: 1, kind: input, shape index: {}]
  %s2 = inlined_call_operand.vmem [shape: f32[1,256], index: 2, kind: input, shape index: {}]
  %s3 = inlined_call_operand.vmem [shape: f32[2,128], index: 3, kind: input, shape index: {}]
  %s4 = inlined_call_operand.hbm [shape: f32[2,128], index: 4, kind: output, shape index: {0}]
  %s5 = inlined_call_operand.hbm [shape: f32[2,128], index: 5, kind: output, shape index: {1}]
  %s6 = inlined_call_operand.hbm [shape: f32[2,128], index: 6, kind: output, shape index: {2}]
  %7 = xla_tuple %s4, %s5, %s6
  %s8 = sld [smem:[#allocation0]]
  $region50: #{tpu_custom_call.1} parent=0
    _
  %s10 = ssub.s32 1, %s8
  %s11 = scalar_select 0, %s10, %s8
  $region1: #{tpu_custom_call.1} parent=0
    #allocation2 [shape = 'u8[8192]{0}', space=vmem, size = 0x2000, scoped, tag = 'input window, operand 0, single buffered']
    #allocation3 [shape = 's32[1]{0}', space=sflag, size = 0x4, scoped, tag = 'scoped memory for tpu_custom_call.1']
    #allocation4 [shape = 's32[1]{0}', space=sflag, size = 0x4, scoped, tag = 'scoped memory for tpu_custom_call.1']
    #allocation5 [shape = 'u8[524288]{0}', space=vmem, size = 0x80000, scoped, tag = 'input window, operand 1, single buffered']
    #allocation6 [shape = 's32[1]{0}', space=sflag, size = 0x4, scoped, tag = 'scoped memory for tpu_custom_call.1']
    #allocation7 [shape = 'u8[1024]{0}', space=vmem, size = 0x400, scoped, tag = 'output window, operand 0, single buffered']
    #allocation8 [shape = 'u8[1024]{0}', space=vmem, size = 0x400, scoped, tag = 'output window, operand 1, single buffered']
    #allocation9 [shape = 's32[1]{0}', space=sflag, size = 0x4, scoped, tag = 'scoped memory for tpu_custom_call.1']
    #allocation10 [shape = 'u8[1024]{0}', space=vmem, size = 0x400, scoped, tag = 'output window, operand 2, single buffered']
    %12 = vsyncpa [#allocation3], 0
    %13 = vsyncpa [#allocation6], 0
    %14 = vsyncpa [#allocation4], 0
    %15 = vsyncpa [#allocation9], 0
    // Predicated region
    $region2: #{tpu_custom_call.1} parent=1 // pred_check
      _
    $region3: #{tpu_custom_call.1} parent=1 // pred_check_branch
      %17 = sbr.rel (0) target = $region5
    $region4: #{tpu_custom_call.1} parent=1 // pred_region
      %s19 = ssub.s32 256, 256
      %20 = vsyncadd [#allocation3], %s19
      %s22 = sshll.u32 [#allocation2], 4
      %s23 = int_to_ptr.vmem [resolvable:$true] %s22
      %25 = dma.hbm_to_vmem [thread:$0]  %s0, 256, %s23, [#allocation3]
    $region5: #{tpu_custom_call.1} parent=1 // pred_fallthru
      _
    // Predicated region
    $region6: #{tpu_custom_call.1} parent=1 // pred_check
      _
    $region7: #{tpu_custom_call.1} parent=1 // pred_check_branch
      %27 = sbr.rel (0) target = $region9
    $region8: #{tpu_custom_call.1} parent=1 // pred_region
      %s29 = ssub.s32 16384, 16384
      %30 = vsyncadd [#allocation6], %s29
      %s31 = sshll.u32 [#allocation5], 4
      %s32 = int_to_ptr.vmem [resolvable:$true] %s31
      %37 = dma.hbm_to_vmem [thread:$0]  %s1, 16384, %s32, [#allocation6], 128, 128, 8
    $region9: #{tpu_custom_call.1} parent=1 // pred_fallthru
      _
    // Predicated region
    $region10: #{tpu_custom_call.1} parent=1 // pred_check
      _
    $region11: #{tpu_custom_call.1} parent=1 // pred_check_branch
      %39 = sbr.rel (0) target = $region13
    $region12: #{tpu_custom_call.1} parent=1 // pred_region
      _
    $region13: #{tpu_custom_call.1} parent=1 // pred_fallthru
      _
    // Predicated region
    $region14: #{tpu_custom_call.1} parent=1 // pred_check
      _
    $region15: #{tpu_custom_call.1} parent=1 // pred_check_branch
      %41 = sbr.rel (0) target = $region17
    $region16: #{tpu_custom_call.1} parent=1 // pred_region
      _
    $region17: #{tpu_custom_call.1} parent=1 // pred_fallthru
      _
    // Predicated region
    $region18: #{tpu_custom_call.1} parent=1 // pred_check
      _
    $region19: #{tpu_custom_call.1} parent=1 // pred_check_branch
      %43 = sbr.rel (0) target = $region21
    $region20: #{tpu_custom_call.1} parent=1 // pred_region
      %44 = dma.done [#allocation3], 256
    $region21: #{tpu_custom_call.1} parent=1 // pred_fallthru
      _
    // Predicated region
    $region22: #{tpu_custom_call.1} parent=1 // pred_check
      _
    $region23: #{tpu_custom_call.1} parent=1 // pred_check_branch
      %46 = sbr.rel (0) target = $region25
    $region24: #{tpu_custom_call.1} parent=1 // pred_region
      %47 = dma.done [#allocation6], 16384
    $region25: #{tpu_custom_call.1} parent=1 // pred_fallthru
      _
    %v48 = vld [vmem:[#allocation2] sm:$0xff]
    %v49 = vld [vmem:[#allocation2 + $0x8] sm:$0xff]
    %v52 = vcombine.high %v48, %v48
    %v54 = vunpack.c.l.s4 1983009808
    %v55 = vunpack.c.0.s8 %v54
    %v56 = vlaneseq
    %v57 = vshrl.u32 %v56, 7
    %v58 = vsub.s32 %v55, %v57
    %v59 = vrot.slane %v48, %v58
    %v61 = vunpack.c.l.s4 1983009808
    %v62 = vunpack.c.0.s8 %v61
    %v63 = vlaneseq
    %v64 = vshrl.u32 %v63, 7
    %v65 = vsub.s32 %v62, %v64
    %v66 = vrot.slane %v52, %v65
    %v67 = vcombine.high %v59, %v59
    %v68 = vcombine.high %v66, %v66
    %v69 = vcombine.high %v49, %v49
    %v71 = vunpack.c.l.s4 1983009808
    %v72 = vunpack.c.0.s8 %v71
    %v73 = vlaneseq
    %v74 = vshrl.u32 %v73, 7
    %v75 = vsub.s32 %v72, %v74
    %v76 = vrot.slane %v49, %v75
    %v78 = vunpack.c.l.s4 1983009808
    %v79 = vunpack.c.0.s8 %v78
    %v80 = vlaneseq
    %v81 = vshrl.u32 %v80, 7
    %v82 = vsub.s32 %v79, %v81
    %v83 = vrot.slane %v69, %v82
    %v84 = vcombine.high %v76, %v76
    %v85 = vcombine.high %v83, %v83
    %v94 = vpack.c.bf16 %v59, %v59
    %v95 = vpack.c.bf16 %v67, %v67
    %v96 = vpack.c.bf16 %v66, %v66
    %v97 = vpack.c.bf16 %v68, %v68
    %v98 = vpack.c.bf16 %v76, %v76
    %v99 = vpack.c.bf16 %v84, %v84
    %v100 = vpack.c.bf16 %v83, %v83
    %v101 = vpack.c.bf16 %v85, %v85
    %v102 = vld [vmem:[#allocation5] sm:$0xff]
    %v103 = vld [vmem:[#allocation5 + $0x8] sm:$0xff]
    %v104 = vld [vmem:[#allocation5 + $0x10] sm:$0xff]
    %v105 = vld [vmem:[#allocation5 + $0x18] sm:$0xff]
    %v106 = vld [vmem:[#allocation5 + $0x20] sm:$0xff]
    %v107 = vld [vmem:[#allocation5 + $0x28] sm:$0xff]
    %v108 = vld [vmem:[#allocation5 + $0x30] sm:$0xff]
    %v109 = vld [vmem:[#allocation5 + $0x38] sm:$0xff]
    %v110 = vld [vmem:[#allocation5 + $0x40] sm:$0xff]
    %v111 = vld [vmem:[#allocation5 + $0x48] sm:$0xff]
    %v112 = vld [vmem:[#allocation5 + $0x50] sm:$0xff]
    %v113 = vld [vmem:[#allocation5 + $0x58] sm:$0xff]
    %v114 = vld [vmem:[#allocation5 + $0x60] sm:$0xff]
    %v115 = vld [vmem:[#allocation5 + $0x68] sm:$0xff]
    %v116 = vld [vmem:[#allocation5 + $0x70] sm:$0xff]
    %v117 = vld [vmem:[#allocation5 + $0x78] sm:$0xff]
    %v118 = vld [vmem:[#allocation5 + $0x80] sm:$0xff]
    %v119 = vld [vmem:[#allocation5 + $0x88] sm:$0xff]
    %v120 = vld [vmem:[#allocation5 + $0x90] sm:$0xff]
    %v121 = vld [vmem:[#allocation5 + $0x98] sm:$0xff]
    %v122 = vld [vmem:[#allocation5 + $0xa0] sm:$0xff]
    %v123 = vld [vmem:[#allocation5 + $0xa8] sm:$0xff]
    %v124 = vld [vmem:[#allocation5 + $0xb0] sm:$0xff]
    %v125 = vld [vmem:[#allocation5 + $0xb8] sm:$0xff]
    %v126 = vld [vmem:[#allocation5 + $0xc0] sm:$0xff]
    %v127 = vld [vmem:[#allocation5 + $0xc8] sm:$0xff]
    %v128 = vld [vmem:[#allocation5 + $0xd0] sm:$0xff]
    %v129 = vld [vmem:[#allocation5 + $0xd8] sm:$0xff]
    %v130 = vld [vmem:[#allocation5 + $0xe0] sm:$0xff]
    %v131 = vld [vmem:[#allocation5 + $0xe8] sm:$0xff]
    %v132 = vld [vmem:[#allocation5 + $0xf0] sm:$0xff]
    %v133 = vld [vmem:[#allocation5 + $0xf8] sm:$0xff]
    %v134 = vld [vmem:[#allocation5 + $0x100] sm:$0xff]
    %v135 = vld [vmem:[#allocation5 + $0x108] sm:$0xff]
    %v136 = vld [vmem:[#allocation5 + $0x110] sm:$0xff]
    %v137 = vld [vmem:[#allocation5 + $0x118] sm:$0xff]
    %v138 = vld [vmem:[#allocation5 + $0x120] sm:$0xff]
    %v139 = vld [vmem:[#allocation5 + $0x128] sm:$0xff]
    %v140 = vld [vmem:[#allocation5 + $0x130] sm:$0xff]
    %v141 = vld [vmem:[#allocation5 + $0x138] sm:$0xff]
    %v142 = vld [vmem:[#allocation5 + $0x140] sm:$0xff]
    %v143 = vld [vmem:[#allocation5 + $0x148] sm:$0xff]
    %v144 = vld [vmem:[#allocation5 + $0x150] sm:$0xff]
    %v145 = vld [vmem:[#allocation5 + $0x158] sm:$0xff]
    %v146 = vld [vmem:[#allocation5 + $0x160] sm:$0xff]
    %v147 = vld [vmem:[#allocation5 + $0x168] sm:$0xff]
    %v148 = vld [vmem:[#allocation5 + $0x170] sm:$0xff]
    %v149 = vld [vmem:[#allocation5 + $0x178] sm:$0xff]
    %v150 = vld [vmem:[#allocation5 + $0x180] sm:$0xff]
    %v151 = vld [vmem:[#allocation5 + $0x188] sm:$0xff]
    %v152 = vld [vmem:[#allocation5 + $0x190] sm:$0xff]
    %v153 = vld [vmem:[#allocation5 + $0x198] sm:$0xff]
    %v154 = vld [vmem:[#allocation5 + $0x1a0] sm:$0xff]
    %v155 = vld [vmem:[#allocation5 + $0x1a8] sm:$0xff]
    %v156 = vld [vmem:[#allocation5 + $0x1b0] sm:$0xff]
    %v157 = vld [vmem:[#allocation5 + $0x1b8] sm:$0xff]
    %v158 = vld [vmem:[#allocation5 + $0x1c0] sm:$0xff]
    %v159 = vld [vmem:[#allocation5 + $0x1c8] sm:$0xff]
    %v160 = vld [vmem:[#allocation5 + $0x1d0] sm:$0xff]
    %v161 = vld [vmem:[#allocation5 + $0x1d8] sm:$0xff]
    %v162 = vld [vmem:[#allocation5 + $0x1e0] sm:$0xff]
    %v163 = vld [vmem:[#allocation5 + $0x1e8] sm:$0xff]
    %v164 = vld [vmem:[#allocation5 + $0x1f0] sm:$0xff]
    %v165 = vld [vmem:[#allocation5 + $0x1f8] sm:$0xff]
    %v166 = vld [vmem:[#allocation5 + $0x200] sm:$0xff]
    %v167 = vld [vmem:[#allocation5 + $0x208] sm:$0xff]
    %v168 = vld [vmem:[#allocation5 + $0x210] sm:$0xff]
    %v169 = vld [vmem:[#allocation5 + $0x218] sm:$0xff]
    %v170 = vld [vmem:[#allocation5 + $0x220] sm:$0xff]
    %v171 = vld [vmem:[#allocation5 + $0x228] sm:$0xff]
    %v172 = vld [vmem:[#allocation5 + $0x230] sm:$0xff]
    %v173 = vld [vmem:[#allocation5 + $0x238] sm:$0xff]
    %v174 = vld [vmem:[#allocation5 + $0x240] sm:$0xff]
    %v175 = vld [vmem:[#allocation5 + $0x248] sm:$0xff]
    %v176 = vld [vmem:[#allocation5 + $0x250] sm:$0xff]
    %v177 = vld [vmem:[#allocation5 + $0x258] sm:$0xff]
    %v178 = vld [vmem:[#allocation5 + $0x260] sm:$0xff]
    %v179 = vld [vmem:[#allocation5 + $0x268] sm:$0xff]
    %v180 = vld [vmem:[#allocation5 + $0x270] sm:$0xff]
    %v181 = vld [vmem:[#allocation5 + $0x278] sm:$0xff]
    %v182 = vld [vmem:[#allocation5 + $0x280] sm:$0xff]
    %v183 = vld [vmem:[#allocation5 + $0x288] sm:$0xff]
    %v184 = vld [vmem:[#allocation5 + $0x290] sm:$0xff]
    %v185 = vld [vmem:[#allocation5 + $0x298] sm:$0xff]
    %v186 = vld [vmem:[#allocation5 + $0x2a0] sm:$0xff]
    %v187 = vld [vmem:[#allocation5 + $0x2a8] sm:$0xff]
    %v188 = vld [vmem:[#allocation5 + $0x2b0] sm:$0xff]
    %v189 = vld [vmem:[#allocation5 + $0x2b8] sm:$0xff]
    %v190 = vld [vmem:[#allocation5 + $0x2c0] sm:$0xff]
    %v191 = vld [vmem:[#allocation5 + $0x2c8] sm:$0xff]
    %v192 = vld [vmem:[#allocation5 + $0x2d0] sm:$0xff]
    %v193 = vld [vmem:[#allocation5 + $0x2d8] sm:$0xff]
    %v194 = vld [vmem:[#allocation5 + $0x2e0] sm:$0xff]
    %v195 = vld [vmem:[#allocation5 + $0x2e8] sm:$0xff]
    %v196 = vld [vmem:[#allocation5 + $0x2f0] sm:$0xff]
    %v197 = vld [vmem:[#allocation5 + $0x2f8] sm:$0xff]
    %v198 = vld [vmem:[#allocation5 + $0x300] sm:$0xff]
    %v199 = vld [vmem:[#allocation5 + $0x308] sm:$0xff]
    %v200 = vld [vmem:[#allocation5 + $0x310] sm:$0xff]
    %v201 = vld [vmem:[#allocation5 + $0x318] sm:$0xff]
    %v202 = vld [vmem:[#allocation5 + $0x320] sm:$0xff]
    %v203 = vld [vmem:[#allocation5 + $0x328] sm:$0xff]
    %v204 = vld [vmem:[#allocation5 + $0x330] sm:$0xff]
    %v205 = vld [vmem:[#allocation5 + $0x338] sm:$0xff]
    %v206 = vld [vmem:[#allocation5 + $0x340] sm:$0xff]
    %v207 = vld [vmem:[#allocation5 + $0x348] sm:$0xff]
    %v208 = vld [vmem:[#allocation5 + $0x350] sm:$0xff]
    %v209 = vld [vmem:[#allocation5 + $0x358] sm:$0xff]
    %v210 = vld [vmem:[#allocation5 + $0x360] sm:$0xff]
    %v211 = vld [vmem:[#allocation5 + $0x368] sm:$0xff]
    %v212 = vld [vmem:[#allocation5 + $0x370] sm:$0xff]
    %v213 = vld [vmem:[#allocation5 + $0x378] sm:$0xff]
    %v214 = vld [vmem:[#allocation5 + $0x380] sm:$0xff]
    %v215 = vld [vmem:[#allocation5 + $0x388] sm:$0xff]
    %v216 = vld [vmem:[#allocation5 + $0x390] sm:$0xff]
    %v217 = vld [vmem:[#allocation5 + $0x398] sm:$0xff]
    %v218 = vld [vmem:[#allocation5 + $0x3a0] sm:$0xff]
    %v219 = vld [vmem:[#allocation5 + $0x3a8] sm:$0xff]
    %v220 = vld [vmem:[#allocation5 + $0x3b0] sm:$0xff]
    %v221 = vld [vmem:[#allocation5 + $0x3b8] sm:$0xff]
    %v222 = vld [vmem:[#allocation5 + $0x3c0] sm:$0xff]
    %v223 = vld [vmem:[#allocation5 + $0x3c8] sm:$0xff]
    %v224 = vld [vmem:[#allocation5 + $0x3d0] sm:$0xff]
    %v225 = vld [vmem:[#allocation5 + $0x3d8] sm:$0xff]
    %v226 = vld [vmem:[#allocation5 + $0x3e0] sm:$0xff]
    %v227 = vld [vmem:[#allocation5 + $0x3e8] sm:$0xff]
    %v228 = vld [vmem:[#allocation5 + $0x3f0] sm:$0xff]
    %v229 = vld [vmem:[#allocation5 + $0x3f8] sm:$0xff]
    %v230 = vld [vmem:[%s2] sm:$0x3]
    %v232 = vlaneseq
    %v233 = vshrl.u32 %v232, 7
    %v234 = vsub.s32 0, %v233
    %v235 = vrot.slane %v230, %v234
    %v236 = vlaneseq
    %v237 = vshrl.u32 %v236, 7
    %v238 = vsub.s32 1, %v237
    %v239 = vrot.slane %v230, %v238
    %v370 = vunpack.c.l.b16 %v102
    %v371 = vunpack.c.h.b16 %v102
    %v372 = vunpack.c.l.b16 %v103
    %v373 = vunpack.c.h.b16 %v103
    %v374 = vunpack.c.l.b16 %v104
    %v375 = vunpack.c.h.b16 %v104
    %v376 = vunpack.c.l.b16 %v105
    %v377 = vunpack.c.h.b16 %v105
    %v378 = vunpack.c.l.b16 %v106
    %v379 = vunpack.c.h.b16 %v106
    %v380 = vunpack.c.l.b16 %v107
    %v381 = vunpack.c.h.b16 %v107
    %v382 = vunpack.c.l.b16 %v108
    %v383 = vunpack.c.h.b16 %v108
    %v384 = vunpack.c.l.b16 %v109
    %v385 = vunpack.c.h.b16 %v109
    %v386 = vunpack.c.l.b16 %v110
    %v387 = vunpack.c.h.b16 %v110
    %v388 = vunpack.c.l.b16 %v111
    %v389 = vunpack.c.h.b16 %v111
    %v390 = vunpack.c.l.b16 %v112
    %v391 = vunpack.c.h.b16 %v112
    %v392 = vunpack.c.l.b16 %v113
    %v393 = vunpack.c.h.b16 %v113
    %v394 = vunpack.c.l.b16 %v114
    %v395 = vunpack.c.h.b16 %v114
    %v396 = vunpack.c.l.b16 %v115
    %v397 = vunpack.c.h.b16 %v115
    %v398 = vunpack.c.l.b16 %v116
    %v399 = vunpack.c.h.b16 %v116
    %v400 = vunpack.c.l.b16 %v117
    %v401 = vunpack.c.h.b16 %v117
    %v402 = vunpack.c.l.b16 %v118
    %v403 = vunpack.c.h.b16 %v118
    %v404 = vunpack.c.l.b16 %v119
    %v405 = vunpack.c.h.b16 %v119
    %v406 = vunpack.c.l.b16 %v120
    %v407 = vunpack.c.h.b16 %v120
    %v408 = vunpack.c.l.b16 %v121
    %v409 = vunpack.c.h.b16 %v121
    %v410 = vunpack.c.l.b16 %v122
    %v411 = vunpack.c.h.b16 %v122
    %v412 = vunpack.c.l.b16 %v123
    %v413 = vunpack.c.h.b16 %v123
    %v414 = vunpack.c.l.b16 %v124
    %v415 = vunpack.c.h.b16 %v124
    %v416 = vunpack.c.l.b16 %v125
    %v417 = vunpack.c.h.b16 %v125
    %v418 = vunpack.c.l.b16 %v126
    %v419 = vunpack.c.h.b16 %v126
    %v420 = vunpack.c.l.b16 %v127
    %v421 = vunpack.c.h.b16 %v127
    %v422 = vunpack.c.l.b16 %v128
    %v423 = vunpack.c.h.b16 %v128
    %v424 = vunpack.c.l.b16 %v129
    %v425 = vunpack.c.h.b16 %v129
    %v426 = vunpack.c.l.b16 %v130
    %v427 = vunpack.c.h.b16 %v130
    %v428 = vunpack.c.l.b16 %v131
    %v429 = vunpack.c.h.b16 %v131
    %v430 = vunpack.c.l.b16 %v132
    %v431 = vunpack.c.h.b16 %v132
    %v432 = vunpack.c.l.b16 %v133
    %v433 = vunpack.c.h.b16 %v133
    %v434 = vunpack.c.l.b16 %v134
    %v435 = vunpack.c.h.b16 %v134
    %v436 = vunpack.c.l.b16 %v135
    %v437 = vunpack.c.h.b16 %v135
    %v438 = vunpack.c.l.b16 %v136
    %v439 = vunpack.c.h.b16 %v136
    %v440 = vunpack.c.l.b16 %v137
    %v441 = vunpack.c.h.b16 %v137
    %v442 = vunpack.c.l.b16 %v138
    %v443 = vunpack.c.h.b16 %v138
    %v444 = vunpack.c.l.b16 %v139
    %v445 = vunpack.c.h.b16 %v139
    %v446 = vunpack.c.l.b16 %v140
    %v447 = vunpack.c.h.b16 %v140
    %v448 = vunpack.c.l.b16 %v141
    %v449 = vunpack.c.h.b16 %v141
    %v450 = vunpack.c.l.b16 %v142
    %v451 = vunpack.c.h.b16 %v142
    %v452 = vunpack.c.l.b16 %v143
    %v453 = vunpack.c.h.b16 %v143
    %v454 = vunpack.c.l.b16 %v144
    %v455 = vunpack.c.h.b16 %v144
    %v456 = vunpack.c.l.b16 %v145
    %v457 = vunpack.c.h.b16 %v145
    %v458 = vunpack.c.l.b16 %v146
    %v459 = vunpack.c.h.b16 %v146
    %v460 = vunpack.c.l.b16 %v147
    %v461 = vunpack.c.h.b16 %v147
    %v462 = vunpack.c.l.b16 %v148
    %v463 = vunpack.c.h.b16 %v148
    %v464 = vunpack.c.l.b16 %v149
    %v465 = vunpack.c.h.b16 %v149
    %v466 = vunpack.c.l.b16 %v150
    %v467 = vunpack.c.h.b16 %v150
    %v468 = vunpack.c.l.b16 %v151
    %v469 = vunpack.c.h.b16 %v151
    %v470 = vunpack.c.l.b16 %v152
    %v471 = vunpack.c.h.b16 %v152
    %v472 = vunpack.c.l.b16 %v153
    %v473 = vunpack.c.h.b16 %v153
    %v474 = vunpack.c.l.b16 %v154
    %v475 = vunpack.c.h.b16 %v154
    %v476 = vunpack.c.l.b16 %v155
    %v477 = vunpack.c.h.b16 %v155
    %v478 = vunpack.c.l.b16 %v156
    %v479 = vunpack.c.h.b16 %v156
    %v480 = vunpack.c.l.b16 %v157
    %v481 = vunpack.c.h.b16 %v157
    %v482 = vunpack.c.l.b16 %v158
    %v483 = vunpack.c.h.b16 %v158
    %v484 = vunpack.c.l.b16 %v159
    %v485 = vunpack.c.h.b16 %v159
    %v486 = vunpack.c.l.b16 %v160
    %v487 = vunpack.c.h.b16 %v160
    %v488 = vunpack.c.l.b16 %v161
    %v489 = vunpack.c.h.b16 %v161
    %v490 = vunpack.c.l.b16 %v162
    %v491 = vunpack.c.h.b16 %v162
    %v492 = vunpack.c.l.b16 %v163
    %v493 = vunpack.c.h.b16 %v163
    %v494 = vunpack.c.l.b16 %v164
    %v495 = vunpack.c.h.b16 %v164
    %v496 = vunpack.c.l.b16 %v165
    %v497 = vunpack.c.h.b16 %v165
    %v498 = vunpack.c.l.b16 %v166
    %v499 = vunpack.c.h.b16 %v166
    %v500 = vunpack.c.l.b16 %v167
    %v501 = vunpack.c.h.b16 %v167
    %v502 = vunpack.c.l.b16 %v168
    %v503 = vunpack.c.h.b16 %v168
    %v504 = vunpack.c.l.b16 %v169
    %v505 = vunpack.c.h.b16 %v169
    %v506 = vunpack.c.l.b16 %v170
    %v507 = vunpack.c.h.b16 %v170
    %v508 = vunpack.c.l.b16 %v171
    %v509 = vunpack.c.h.b16 %v171
    %v510 = vunpack.c.l.b16 %v172
    %v511 = vunpack.c.h.b16 %v172
    %v512 = vunpack.c.l.b16 %v173
    %v513 = vunpack.c.h.b16 %v173
    %v514 = vunpack.c.l.b16 %v174
    %v515 = vunpack.c.h.b16 %v174
    %v516 = vunpack.c.l.b16 %v175
    %v517 = vunpack.c.h.b16 %v175
    %v518 = vunpack.c.l.b16 %v176
    %v519 = vunpack.c.h.b16 %v176
    %v520 = vunpack.c.l.b16 %v177
    %v521 = vunpack.c.h.b16 %v177
    %v522 = vunpack.c.l.b16 %v178
    %v523 = vunpack.c.h.b16 %v178
    %v524 = vunpack.c.l.b16 %v179
    %v525 = vunpack.c.h.b16 %v179
    %v526 = vunpack.c.l.b16 %v180
    %v527 = vunpack.c.h.b16 %v180
    %v528 = vunpack.c.l.b16 %v181
    %v529 = vunpack.c.h.b16 %v181
    %v530 = vunpack.c.l.b16 %v182
    %v531 = vunpack.c.h.b16 %v182
    %v532 = vunpack.c.l.b16 %v183
    %v533 = vunpack.c.h.b16 %v183
    %v534 = vunpack.c.l.b16 %v184
    %v535 = vunpack.c.h.b16 %v184
    %v536 = vunpack.c.l.b16 %v185
    %v537 = vunpack.c.h.b16 %v185
    %v538 = vunpack.c.l.b16 %v186
    %v539 = vunpack.c.h.b16 %v186
    %v540 = vunpack.c.l.b16 %v187
    %v541 = vunpack.c.h.b16 %v187
    %v542 = vunpack.c.l.b16 %v188
    %v543 = vunpack.c.h.b16 %v188
    %v544 = vunpack.c.l.b16 %v189
    %v545 = vunpack.c.h.b16 %v189
    %v546 = vunpack.c.l.b16 %v190
    %v547 = vunpack.c.h.b16 %v190
    %v548 = vunpack.c.l.b16 %v191
    %v549 = vunpack.c.h.b16 %v191
    %v550 = vunpack.c.l.b16 %v192
    %v551 = vunpack.c.h.b16 %v192
    %v552 = vunpack.c.l.b16 %v193
    %v553 = vunpack.c.h.b16 %v193
    %v554 = vunpack.c.l.b16 %v194
    %v555 = vunpack.c.h.b16 %v194
    %v556 = vunpack.c.l.b16 %v195
    %v557 = vunpack.c.h.b16 %v195
    %v558 = vunpack.c.l.b16 %v196
    %v559 = vunpack.c.h.b16 %v196
    %v560 = vunpack.c.l.b16 %v197
    %v561 = vunpack.c.h.b16 %v197
    %v562 = vunpack.c.l.b16 %v198
    %v563 = vunpack.c.h.b16 %v198
    %v564 = vunpack.c.l.b16 %v199
    %v565 = vunpack.c.h.b16 %v199
    %v566 = vunpack.c.l.b16 %v200
    %v567 = vunpack.c.h.b16 %v200
    %v568 = vunpack.c.l.b16 %v201
    %v569 = vunpack.c.h.b16 %v201
    %v570 = vunpack.c.l.b16 %v202
    %v571 = vunpack.c.h.b16 %v202
    %v572 = vunpack.c.l.b16 %v203
    %v573 = vunpack.c.h.b16 %v203
    %v574 = vunpack.c.l.b16 %v204
    %v575 = vunpack.c.h.b16 %v204
    %v576 = vunpack.c.l.b16 %v205
    %v577 = vunpack.c.h.b16 %v205
    %v578 = vunpack.c.l.b16 %v206
    %v579 = vunpack.c.h.b16 %v206
    %v580 = vunpack.c.l.b16 %v207
    %v581 = vunpack.c.h.b16 %v207
    %v582 = vunpack.c.l.b16 %v208
    %v583 = vunpack.c.h.b16 %v208
    %v584 = vunpack.c.l.b16 %v209
    %v585 = vunpack.c.h.b16 %v209
    %v586 = vunpack.c.l.b16 %v210
    %v587 = vunpack.c.h.b16 %v210
    %v588 = vunpack.c.l.b16 %v211
    %v589 = vunpack.c.h.b16 %v211
    %v590 = vunpack.c.l.b16 %v212
    %v591 = vunpack.c.h.b16 %v212
    %v592 = vunpack.c.l.b16 %v213
    %v593 = vunpack.c.h.b16 %v213
    %v594 = vunpack.c.l.b16 %v214
    %v595 = vunpack.c.h.b16 %v214
    %v596 = vunpack.c.l.b16 %v215
    %v597 = vunpack.c.h.b16 %v215
    %v598 = vunpack.c.l.b16 %v216
    %v599 = vunpack.c.h.b16 %v216
    %v600 = vunpack.c.l.b16 %v217
    %v601 = vunpack.c.h.b16 %v217
    %v602 = vunpack.c.l.b16 %v218
    %v603 = vunpack.c.h.b16 %v218
    %v604 = vunpack.c.l.b16 %v219
    %v605 = vunpack.c.h.b16 %v219
    %v606 = vunpack.c.l.b16 %v220
    %v607 = vunpack.c.h.b16 %v220
    %v608 = vunpack.c.l.b16 %v221
    %v609 = vunpack.c.h.b16 %v221
    %v610 = vunpack.c.l.b16 %v222
    %v611 = vunpack.c.h.b16 %v222
    %v612 = vunpack.c.l.b16 %v223
    %v613 = vunpack.c.h.b16 %v223
    %v614 = vunpack.c.l.b16 %v224
    %v615 = vunpack.c.h.b16 %v224
    %v616 = vunpack.c.l.b16 %v225
    %v617 = vunpack.c.h.b16 %v225
    %v618 = vunpack.c.l.b16 %v226
    %v619 = vunpack.c.h.b16 %v226
    %v620 = vunpack.c.l.b16 %v227
    %v621 = vunpack.c.h.b16 %v227
    %v622 = vunpack.c.l.b16 %v228
    %v623 = vunpack.c.h.b16 %v228
    %v624 = vunpack.c.l.b16 %v229
    %v625 = vunpack.c.h.b16 %v229
    %v626 = vpack.c.b16 %v372, %v370
    %v627 = vpack.c.b16 %v373, %v371
    %v628 = vpack.c.b16 %v376, %v374
    %v629 = vpack.c.b16 %v377, %v375
    %v630 = vpack.c.b16 %v380, %v378
    %v631 = vpack.c.b16 %v381, %v379
    %v632 = vpack.c.b16 %v384, %v382
    %v633 = vpack.c.b16 %v385, %v383
    %v634 = vpack.c.b16 %v388, %v386
    %v635 = vpack.c.b16 %v389, %v387
    %v636 = vpack.c.b16 %v392, %v390
    %v637 = vpack.c.b16 %v393, %v391
    %v638 = vpack.c.b16 %v396, %v394
    %v639 = vpack.c.b16 %v397, %v395
    %v640 = vpack.c.b16 %v400, %v398
    %v641 = vpack.c.b16 %v401, %v399
    %v642 = vpack.c.b16 %v404, %v402
    %v643 = vpack.c.b16 %v405, %v403
    %v644 = vpack.c.b16 %v408, %v406
    %v645 = vpack.c.b16 %v409, %v407
    %v646 = vpack.c.b16 %v412, %v410
    %v647 = vpack.c.b16 %v413, %v411
    %v648 = vpack.c.b16 %v416, %v414
    %v649 = vpack.c.b16 %v417, %v415
    %v650 = vpack.c.b16 %v420, %v418
    %v651 = vpack.c.b16 %v421, %v419
    %v652 = vpack.c.b16 %v424, %v422
    %v653 = vpack.c.b16 %v425, %v423
    %v654 = vpack.c.b16 %v428, %v426
    %v655 = vpack.c.b16 %v429, %v427
    %v656 = vpack.c.b16 %v432, %v430
    %v657 = vpack.c.b16 %v433, %v431
    %v658 = vpack.c.b16 %v436, %v434
    %v659 = vpack.c.b16 %v437, %v435
    %v660 = vpack.c.b16 %v440, %v438
    %v661 = vpack.c.b16 %v441, %v439
    %v662 = vpack.c.b16 %v444, %v442
    %v663 = vpack.c.b16 %v445, %v443
    %v664 = vpack.c.b16 %v448, %v446
    %v665 = vpack.c.b16 %v449, %v447
    %v666 = vpack.c.b16 %v452, %v450
    %v667 = vpack.c.b16 %v453, %v451
    %v668 = vpack.c.b16 %v456, %v454
    %v669 = vpack.c.b16 %v457, %v455
    %v670 = vpack.c.b16 %v460, %v458
    %v671 = vpack.c.b16 %v461, %v459
    %v672 = vpack.c.b16 %v464, %v462
    %v673 = vpack.c.b16 %v465, %v463
    %v674 = vpack.c.b16 %v468, %v466
    %v675 = vpack.c.b16 %v469, %v467
    %v676 = vpack.c.b16 %v472, %v470
    %v677 = vpack.c.b16 %v473, %v471
    %v678 = vpack.c.b16 %v476, %v474
    %v679 = vpack.c.b16 %v477, %v475
    %v680 = vpack.c.b16 %v480, %v478
    %v681 = vpack.c.b16 %v481, %v479
    %v682 = vpack.c.b16 %v484, %v482
    %v683 = vpack.c.b16 %v485, %v483
    %v684 = vpack.c.b16 %v488, %v486
    %v685 = vpack.c.b16 %v489, %v487
    %v686 = vpack.c.b16 %v492, %v490
    %v687 = vpack.c.b16 %v493, %v491
    %v688 = vpack.c.b16 %v496, %v494
    %v689 = vpack.c.b16 %v497, %v495
    %v690 = vpack.c.b16 %v500, %v498
    %v691 = vpack.c.b16 %v501, %v499
    %v692 = vpack.c.b16 %v504, %v502
    %v693 = vpack.c.b16 %v505, %v503
    %v694 = vpack.c.b16 %v508, %v506
    %v695 = vpack.c.b16 %v509, %v507
    %v696 = vpack.c.b16 %v512, %v510
    %v697 = vpack.c.b16 %v513, %v511
    %v698 = vpack.c.b16 %v516, %v514
    %v699 = vpack.c.b16 %v517, %v515
    %v700 = vpack.c.b16 %v520, %v518
    %v701 = vpack.c.b16 %v521, %v519
    %v702 = vpack.c.b16 %v524, %v522
    %v703 = vpack.c.b16 %v525, %v523
    %v704 = vpack.c.b16 %v528, %v526
    %v705 = vpack.c.b16 %v529, %v527
    %v706 = vpack.c.b16 %v532, %v530
    %v707 = vpack.c.b16 %v533, %v531
    %v708 = vpack.c.b16 %v536, %v534
    %v709 = vpack.c.b16 %v537, %v535
    %v710 = vpack.c.b16 %v540, %v538
    %v711 = vpack.c.b16 %v541, %v539
    %v712 = vpack.c.b16 %v544, %v542
    %v713 = vpack.c.b16 %v545, %v543
    %v714 = vpack.c.b16 %v548, %v546
    %v715 = vpack.c.b16 %v549, %v547
    %v716 = vpack.c.b16 %v552, %v550
    %v717 = vpack.c.b16 %v553, %v551
    %v718 = vpack.c.b16 %v556, %v554
    %v719 = vpack.c.b16 %v557, %v555
    %v720 = vpack.c.b16 %v560, %v558
    %v721 = vpack.c.b16 %v561, %v559
    %v722 = vpack.c.b16 %v564, %v562
    %v723 = vpack.c.b16 %v565, %v563
    %v724 = vpack.c.b16 %v568, %v566
    %v725 = vpack.c.b16 %v569, %v567
    %v726 = vpack.c.b16 %v572, %v570
    %v727 = vpack.c.b16 %v573, %v571
    %v728 = vpack.c.b16 %v576, %v574
    %v729 = vpack.c.b16 %v577, %v575
    %v730 = vpack.c.b16 %v580, %v578
    %v731 = vpack.c.b16 %v581, %v579
    %v732 = vpack.c.b16 %v584, %v582
    %v733 = vpack.c.b16 %v585, %v583
    %v734 = vpack.c.b16 %v588, %v586
    %v735 = vpack.c.b16 %v589, %v587
    %v736 = vpack.c.b16 %v592, %v590
    %v737 = vpack.c.b16 %v593, %v591
    %v738 = vpack.c.b16 %v596, %v594
    %v739 = vpack.c.b16 %v597, %v595
    %v740 = vpack.c.b16 %v600, %v598
    %v741 = vpack.c.b16 %v601, %v599
    %v742 = vpack.c.b16 %v604, %v602
    %v743 = vpack.c.b16 %v605, %v603
    %v744 = vpack.c.b16 %v608, %v606
    %v745 = vpack.c.b16 %v609, %v607
    %v746 = vpack.c.b16 %v612, %v610
    %v747 = vpack.c.b16 %v613, %v611
    %v748 = vpack.c.b16 %v616, %v614
    %v749 = vpack.c.b16 %v617, %v615
    %v750 = vpack.c.b16 %v620, %v618
    %v751 = vpack.c.b16 %v621, %v619
    %v752 = vpack.c.b16 %v624, %v622
    %v753 = vpack.c.b16 %v625, %v623
    %882 = vmatprep.subr.bf16.mxu0 %v641
    %883 = vmatpush1.bf16.msra.mxu0 %v640
    %884 = vmatprep.subr.bf16.mxu0 %v639
    %885 = vmatpush1.bf16.msra.mxu0 %v638
    %886 = vmatprep.subr.bf16.mxu0 %v637
    %887 = vmatpush1.bf16.msra.mxu0 %v636
    %888 = vmatprep.subr.bf16.mxu0 %v635
    %889 = vmatpush1.bf16.msra.mxu0 %v634
    %890 = vmatprep.subr.bf16.mxu0 %v633
    %891 = vmatpush1.bf16.msra.mxu0 %v632
    %892 = vmatprep.subr.bf16.mxu0 %v631
    %893 = vmatpush1.bf16.msra.mxu0 %v630
    %894 = vmatprep.subr.bf16.mxu0 %v629
    %895 = vmatpush1.bf16.msra.mxu0 %v628
    %896 = vmatprep.subr.bf16.mxu0 %v627
    %897 = vmatpush1.bf16.msra.mxu0 %v626
    %898 = vmatprep.subr.bf16.mxu0 %v657
    %899 = vmatpush2.bf16.msra.mxu0 %v656
    %900 = vmatprep.subr.bf16.mxu0 %v655
    %901 = vmatpush2.bf16.msra.mxu0 %v654
    %902 = vmatprep.subr.bf16.mxu0 %v653
    %903 = vmatpush2.bf16.msra.mxu0 %v652
    %904 = vmatprep.subr.bf16.mxu0 %v651
    %905 = vmatpush2.bf16.msra.mxu0 %v650
    %906 = vmatprep.subr.bf16.mxu0 %v649
    %907 = vmatpush2.bf16.msra.mxu0 %v648
    %908 = vmatprep.subr.bf16.mxu0 %v647
    %909 = vmatpush2.bf16.msra.mxu0 %v646
    %910 = vmatprep.subr.bf16.mxu0 %v645
    %911 = vmatpush2.bf16.msra.mxu0 %v644
    %912 = vmatprep.subr.bf16.mxu0 %v643
    %913 = vmatpush2.bf16.msra.mxu0 %v642
    %914 = vmatprep.mubr.bf16.mxu0 %v95
    %915 = vmatmul.mubr.bf16.gmra.mxu0 %v94
    %v916 = vpop.f32.mrf.mxu0
    %v917 = vadd.f32 %v235, %v916
    %v918 = vpop.f32.mrf.mxu0
    %v919 = vadd.f32 %v239, %v918
    %v920 = vpop.f32.mrf.mxu0
    %v921 = vpop.f32.mrf.mxu0
    %922 = vdwg.mxu0
    %923 = vmatprep.subr.bf16.mxu0 %v673
    %924 = vmatpush1.bf16.msra.mxu0 %v672
    %925 = vmatprep.subr.bf16.mxu0 %v671
    %926 = vmatpush1.bf16.msra.mxu0 %v670
    %927 = vmatprep.subr.bf16.mxu0 %v669
    %928 = vmatpush1.bf16.msra.mxu0 %v668
    %929 = vmatprep.subr.bf16.mxu0 %v667
    %930 = vmatpush1.bf16.msra.mxu0 %v666
    %931 = vmatprep.subr.bf16.mxu0 %v665
    %932 = vmatpush1.bf16.msra.mxu0 %v664
    %933 = vmatprep.subr.bf16.mxu0 %v663
    %934 = vmatpush1.bf16.msra.mxu0 %v662
    %935 = vmatprep.subr.bf16.mxu0 %v661
    %936 = vmatpush1.bf16.msra.mxu0 %v660
    %937 = vmatprep.subr.bf16.mxu0 %v659
    %938 = vmatpush1.bf16.msra.mxu0 %v658
    %939 = vmatprep.subr.bf16.mxu0 %v689
    %940 = vmatpush2.bf16.msra.mxu0 %v688
    %941 = vmatprep.subr.bf16.mxu0 %v687
    %942 = vmatpush2.bf16.msra.mxu0 %v686
    %943 = vmatprep.subr.bf16.mxu0 %v685
    %944 = vmatpush2.bf16.msra.mxu0 %v684
    %945 = vmatprep.subr.bf16.mxu0 %v683
    %946 = vmatpush2.bf16.msra.mxu0 %v682
    %947 = vmatprep.subr.bf16.mxu0 %v681
    %948 = vmatpush2.bf16.msra.mxu0 %v680
    %949 = vmatprep.subr.bf16.mxu0 %v679
    %950 = vmatpush2.bf16.msra.mxu0 %v678
    %951 = vmatprep.subr.bf16.mxu0 %v677
    %952 = vmatpush2.bf16.msra.mxu0 %v676
    %953 = vmatprep.subr.bf16.mxu0 %v675
    %954 = vmatpush2.bf16.msra.mxu0 %v674
    %955 = vmatprep.mubr.bf16.mxu0 %v97
    %956 = vmatmul.mubr.bf16.gmra.mxu0 %v96
    %v957 = vpop.f32.mrf.mxu0
    %v958 = vadd.f32 %v917, %v957
    %v959 = vpop.f32.mrf.mxu0
    %v960 = vadd.f32 %v919, %v959
    %v961 = vpop.f32.mrf.mxu0
    %v962 = vpop.f32.mrf.mxu0
    %963 = vdwg.mxu0
    %964 = vmatprep.subr.bf16.mxu0 %v705
    %965 = vmatpush1.bf16.msra.mxu0 %v704
    %966 = vmatprep.subr.bf16.mxu0 %v703
    %967 = vmatpush1.bf16.msra.mxu0 %v702
    %968 = vmatprep.subr.bf16.mxu0 %v701
    %969 = vmatpush1.bf16.msra.mxu0 %v700
    %970 = vmatprep.subr.bf16.mxu0 %v699
    %971 = vmatpush1.bf16.msra.mxu0 %v698
    %972 = vmatprep.subr.bf16.mxu0 %v697
    %973 = vmatpush1.bf16.msra.mxu0 %v696
    %974 = vmatprep.subr.bf16.mxu0 %v695
    %975 = vmatpush1.bf16.msra.mxu0 %v694
    %976 = vmatprep.subr.bf16.mxu0 %v693
    %977 = vmatpush1.bf16.msra.mxu0 %v692
    %978 = vmatprep.subr.bf16.mxu0 %v691
    %979 = vmatpush1.bf16.msra.mxu0 %v690
    %980 = vmatprep.subr.bf16.mxu0 %v721
    %981 = vmatpush2.bf16.msra.mxu0 %v720
    %982 = vmatprep.subr.bf16.mxu0 %v719
    %983 = vmatpush2.bf16.msra.mxu0 %v718
    %984 = vmatprep.subr.bf16.mxu0 %v717
    %985 = vmatpush2.bf16.msra.mxu0 %v716
    %986 = vmatprep.subr.bf16.mxu0 %v715
    %987 = vmatpush2.bf16.msra.mxu0 %v714
    %988 = vmatprep.subr.bf16.mxu0 %v713
    %989 = vmatpush2.bf16.msra.mxu0 %v712
    %990 = vmatprep.subr.bf16.mxu0 %v711
    %991 = vmatpush2.bf16.msra.mxu0 %v710
    %992 = vmatprep.subr.bf16.mxu0 %v709
    %993 = vmatpush2.bf16.msra.mxu0 %v708
    %994 = vmatprep.subr.bf16.mxu0 %v707
    %995 = vmatpush2.bf16.msra.mxu0 %v706
    %996 = vmatprep.mubr.bf16.mxu0 %v99
    %997 = vmatmul.mubr.bf16.gmra.mxu0 %v98
    %v998 = vpop.f32.mrf.mxu0
    %v999 = vadd.f32 %v958, %v998
    %v1000 = vpop.f32.mrf.mxu0
    %v1001 = vadd.f32 %v960, %v1000
    %v1002 = vpop.f32.mrf.mxu0
    %v1003 = vpop.f32.mrf.mxu0
    %1004 = vdwg.mxu0
    %1005 = vmatprep.subr.bf16.mxu0 %v737
    %1006 = vmatpush1.bf16.msra.mxu0 %v736
    %1007 = vmatprep.subr.bf16.mxu0 %v735
    %1008 = vmatpush1.bf16.msra.mxu0 %v734
    %1009 = vmatprep.subr.bf16.mxu0 %v733
    %1010 = vmatpush1.bf16.msra.mxu0 %v732
    %1011 = vmatprep.subr.bf16.mxu0 %v731
    %1012 = vmatpush1.bf16.msra.mxu0 %v730
    %1013 = vmatprep.subr.bf16.mxu0 %v729
    %1014 = vmatpush1.bf16.msra.mxu0 %v728
    %1015 = vmatprep.subr.bf16.mxu0 %v727
    %1016 = vmatpush1.bf16.msra.mxu0 %v726
    %1017 = vmatprep.subr.bf16.mxu0 %v725
    %1018 = vmatpush1.bf16.msra.mxu0 %v724
    %1019 = vmatprep.subr.bf16.mxu0 %v723
    %1020 = vmatpush1.bf16.msra.mxu0 %v722
    %1021 = vmatprep.subr.bf16.mxu0 %v753
    %1022 = vmatpush2.bf16.msra.mxu0 %v752
    %1023 = vmatprep.subr.bf16.mxu0 %v751
    %1024 = vmatpush2.bf16.msra.mxu0 %v750
    %1025 = vmatprep.subr.bf16.mxu0 %v749
    %1026 = vmatpush2.bf16.msra.mxu0 %v748
    %1027 = vmatprep.subr.bf16.mxu0 %v747
    %1028 = vmatpush2.bf16.msra.mxu0 %v746
    %1029 = vmatprep.subr.bf16.mxu0 %v745
    %1030 = vmatpush2.bf16.msra.mxu0 %v744
    %1031 = vmatprep.subr.bf16.mxu0 %v743
    %1032 = vmatpush2.bf16.msra.mxu0 %v742
    %1033 = vmatprep.subr.bf16.mxu0 %v741
    %1034 = vmatpush2.bf16.msra.mxu0 %v740
    %1035 = vmatprep.subr.bf16.mxu0 %v739
    %1036 = vmatpush2.bf16.msra.mxu0 %v738
    %1037 = vmatprep.mubr.bf16.mxu0 %v101
    %1038 = vmatmul.mubr.bf16.gmra.mxu0 %v100
    %v1039 = vpop.f32.mrf.mxu0
    %v1040 = vadd.f32 %v999, %v1039
    %v1041 = vpop.f32.mrf.mxu0
    %v1042 = vadd.f32 %v1001, %v1041
    %v1043 = vpop.f32.mrf.mxu0
    %v1044 = vpop.f32.mrf.mxu0
    %1045 = vdwg.mxu0
    %v1046 = vmax.f32 %v1040, 0.0
    %v1047 = vmax.f32 %v1042, 0.0
    %v1048 = vmul.f32 %v1047, 0.5
    %v1049 = vmul.f32 %v1048, 1.442695
    %v1050 = vpow.pop %v1049
    %v1051 = vld [vmem:[%s3] sm:$0x3]
    %v1052 = vmul.f32 %v1050, %v1051
    %v1053 = vadd.f32 %v1052, %v1046
    %1054 = vst [vmem:[#allocation7] sm:$0x3] %v1053
    %1055 = vst [vmem:[#allocation8] sm:$0x3] %v1046
    %1056 = vst [vmem:[#allocation10] sm:$0x3] %v1047
    // Predicated region
    $region26: #{tpu_custom_call.1} parent=1 // pred_check
      _
    $region27: #{tpu_custom_call.1} parent=1 // pred_check_branch
      %1058 = sbr.rel (0) target = $region29
    $region28: #{tpu_custom_call.1} parent=1 // pred_region
      %s1060 = ssub.s32 32, 32
      %1061 = vsyncadd [#allocation4], %s1060
      %s1063 = sshll.u32 [#allocation7], 4
      %s1064 = int_to_ptr.vmem [resolvable:$true] %s1063
      %1066 = dma.vmem_to_hbm [thread:$0]  %s1064, 32, %s4, [#allocation4]
    $region29: #{tpu_custom_call.1} parent=1 // pred_fallthru
      _
    // Predicated region
    $region30: #{tpu_custom_call.1} parent=1 // pred_check
      _
    $region31: #{tpu_custom_call.1} parent=1 // pred_check_branch
      %1068 = sbr.rel (0) target = $region33
    $region32: #{tpu_custom_call.1} parent=1 // pred_region
      %s1070 = ssub.s32 32, 32
      %1071 = vsyncadd [#allocation9], %s1070
      %s1073 = sshll.u32 [#allocation8], 4
      %s1074 = int_to_ptr.vmem [resolvable:$true] %s1073
      %1076 = dma.vmem_to_hbm [thread:$0]  %s1074, 32, %s5, [#allocation9]
    $region33: #{tpu_custom_call.1} parent=1 // pred_fallthru
      _
    // Predicated region
    $region34: #{tpu_custom_call.1} parent=1 // pred_check
      _
    $region35: #{tpu_custom_call.1} parent=1 // pred_check_branch
      %1078 = sbr.rel (0) target = $region37
    $region36: #{tpu_custom_call.1} parent=1 // pred_region
      %s1080 = ssub.s32 32, 32
      %1081 = vsyncadd [#allocation9], %s1080
      %s1083 = sshll.u32 [#allocation10], 4
      %s1084 = int_to_ptr.vmem [resolvable:$true] %s1083
      %1086 = dma.vmem_to_hbm [thread:$0]  %s1084, 32, %s6, [#allocation9]
    $region37: #{tpu_custom_call.1} parent=1 // pred_fallthru
      _
    // Predicated region
    $region38: #{tpu_custom_call.1} parent=1 // pred_check
      _
    $region39: #{tpu_custom_call.1} parent=1 // pred_check_branch
      %1088 = sbr.rel (0) target = $region41
    $region40: #{tpu_custom_call.1} parent=1 // pred_region
      %1089 = dma.done [#allocation4], 32
    $region41: #{tpu_custom_call.1} parent=1 // pred_fallthru
      _
    // Predicated region
    $region42: #{tpu_custom_call.1} parent=1 // pred_check
      _
    $region43: #{tpu_custom_call.1} parent=1 // pred_check_branch
      %1091 = sbr.rel (0) target = $region45
    $region44: #{tpu_custom_call.1} parent=1 // pred_region
      %1092 = dma.done [#allocation9], 32
    $region45: #{tpu_custom_call.1} parent=1 // pred_fallthru
      _
    // Predicated region
    $region46: #{tpu_custom_call.1} parent=1 // pred_check
      _
    $region47: #{tpu_custom_call.1} parent=1 // pred_check_branch
      %1094 = sbr.rel (0) target = $region49
    $region48: #{tpu_custom_call.1} parent=1 // pred_region
      %1095 = dma.done [#allocation9], 32
    $region49: #{tpu_custom_call.1} parent=1 // pred_fallthru
      _
    %1096 = vsyncpa [#allocation3], 1
    %1097 = vsyncpa [#allocation6], 1
    %1098 = vsyncpa [#allocation4], 1
    %1099 = vsyncpa [#allocation9], 1

</llo_original>
